<compile_context>
chip_gen: v6e
topology: v6e:2x2x1
jax: 0.10.0
libtpu: 0.0.40
codegen_flags: <defaults>
</compile_context>

<pallas_src>
import functools

import jax
import jax.numpy as jnp
import numpy as np
from jax.experimental import pallas as pl
from jax.experimental.pallas import tpu as pltpu


def _round_up(x, m):
    return (x + m - 1) // m * m


def _const_index_map(ndim):
    zeros = (0,) * ndim
    return lambda i: zeros


def _row_index_map(ndim):
    tail = (0,) * (ndim - 1)
    return lambda i: (i,) + tail


@functools.lru_cache(maxsize=1)
def _vmem_capacity_bytes():
    """Per-core VMEM capacity; conservative 64 MiB (v7x) fallback if unknown."""
    try:
        cap = int(pltpu.get_tpu_info().vmem_capacity_bytes)
        if cap > 0:
            return cap
    except Exception:
        pass
    return 64 * 1024 * 1024


def _probe_kernel(x_ref, o_ref):
    o_ref[...] = x_ref[...] + 1.0


@functools.lru_cache(maxsize=1)
def _single_buffer_supported():
    """True iff this JAX/Mosaic build accepts pl.Buffered(1) on pallas_call BlockSpecs."""
    try:
        spec = pl.BlockSpec((8, 128), _const_index_map(2),
                            pipeline_mode=pl.Buffered(1))
    except Exception:
        return False
    try:
        out = pl.pallas_call(
            _probe_kernel,
            out_shape=jax.ShapeDtypeStruct((8, 128), jnp.float32),
            grid=(1,),
            in_specs=[spec],
            out_specs=pl.BlockSpec((8, 128), _row_index_map(2)),
        )(jnp.zeros((8, 128), jnp.float32))
        jax.block_until_ready(out)
        return True
    except Exception:
        return False


def _resident_spec(shape, single_buffer):
    """Constant block index -> operand stays VMEM-resident across grid steps.

    Single-buffered (halves resident-weight VMEM) when pl.Buffered(1) is supported.
    """
    idx = _const_index_map(len(shape))
    if single_buffer:
        return pl.BlockSpec(tuple(shape), idx, pipeline_mode=pl.Buffered(1))
    return pl.BlockSpec(tuple(shape), idx)


def node_network_kernel(mb_ref, fh_ref, w1m_ref, w1fh_ref, b1_ref,
                        w2_ref, b2_ref, w3_ref, b3_ref, out_ref,
                        *, fold_mailbox):
    cdt = w2_ref.dtype  # compute dtype (bf16 fast path / f32 reference path)

    # Activations arrive in their HBM dtype; cast right before the dots.
    if fold_mailbox:
        # Mailbox sum is folded into the K = M*E matmul via the row-tiled W1[:E].
        mb = mb_ref[...].astype(cdt)                      # (TN, M*E)
    else:
        # Large-M path: f32 reduction over messages, then a single K = E matmul.
        mb = jnp.sum(mb_ref[...], axis=1).astype(cdt)     # (TN, M, E) -> (TN, E)
    fh = fh_ref[...].astype(cdt)                          # (TN, F+H)

    # Layer 1: cat([msg_sum, feat, hid], 1) @ W1 + b1 as two MXU passes
    # (mailbox stream + fused feat/hidden stream); f32 accumulation.
    h1 = (jnp.dot(mb, w1m_ref[...], preferred_element_type=jnp.float32)
          + jnp.dot(fh, w1fh_ref[...], preferred_element_type=jnp.float32)
          + b1_ref[...])
    h1 = jnp.maximum(h1, 0.0).astype(cdt)   # bias + ReLU stay f32, then repack

    # Layer 2: Linear + ReLU.
    h2 = jnp.dot(h1, w2_ref[...], preferred_element_type=jnp.float32) + b2_ref[...]
    h2 = jnp.maximum(h2, 0.0).astype(cdt)

    # Layer 3: Linear (no activation); unpadded (TN, O) store in the output dtype.
    out_ref[...] = (jnp.dot(h2, w3_ref[...], preferred_element_type=jnp.float32)
                    + b3_ref[...]).astype(out_ref.dtype)


def prepare_params(params, *, num_messages, edge_size, feature_size, hidden_size,
                   fold_mailbox=None, compute_dtype=jnp.bfloat16):
    """One-time weight preprocessing, hoisted out of the per-call forward path.

    Pads the hidden width to a 128-lane multiple (inert: zero bias + ReLU(0)=0 and
    zero W2/W3 rows), splits W1 into mailbox / (features+hidden) slices, optionally
    row-tiles the mailbox slice by M so the mailbox sum folds into the first
    matmul, and casts matmul weights to `compute_dtype` (biases stay f32).

    Returns (prepared_dict, fold_mailbox).
    """
    w1, b1, w2, b2, w3, b3 = params
    E, F, H, M = edge_size, feature_size, hidden_size, num_messages
    Hd = w1.shape[1]
    O = w3.shape[1]
    assert w1.shape[0] == E + F + H
    if fold_mailbox is None:
        fold_mailbox = M <= 8   # tiled-weight fold only while the Mx blowup is cheap

    Hd_pad = _round_up(Hd, 128)
    f32 = jnp.float32
    w1p = jnp.zeros((E + F + H, Hd_pad), f32).at[:, :Hd].set(w1.astype(f32))
    w1e = w1p[:E]                                          # (E, Hd_pad)
    # Fold: sum_m mailbox[n,m,:] @ W1[:E] == mailbox.reshape(N, M*E) @ tile(W1[:E], (M,1))
    w1m = jnp.tile(w1e, (M, 1)) if fold_mailbox else w1e
    w1fh = w1p[E:]                                         # (F+H, Hd_pad)
    w2p = jnp.zeros((Hd_pad, Hd_pad), f32).at[:Hd, :Hd].set(w2.astype(f32))
    w3p = jnp.zeros((Hd_pad, O), f32).at[:Hd, :].set(w3.astype(f32))

    prepared = {
        "w1m": w1m.astype(compute_dtype),
        "w1fh": w1fh.astype(compute_dtype),
        "b1": jnp.zeros((1, Hd_pad), f32).at[0, :Hd].set(b1.astype(f32)),
        "w2": w2p.astype(compute_dtype),
        "b2": jnp.zeros((1, Hd_pad), f32).at[0, :Hd].set(b2.astype(f32)),
        "w3": w3p.astype(compute_dtype),
        "b3": b3.reshape(1, O).astype(f32),
    }
    return prepared, fold_mailbox


@functools.partial(
    jax.jit,
    static_argnames=("fold_mailbox", "block_n", "out_dtype", "single_buffer", "vmem_cap"))
def _forward_impl(mailbox, node_features, node_hidden_rep, prepared, *,
                  fold_mailbox, block_n, out_dtype, single_buffer, vmem_cap):
    N, M, E = mailbox.shape
    F = node_features.shape[1]
    H = node_hidden_rep.shape[1]
    w1m, w1fh = prepared["w1m"], prepared["w1fh"]
    b1, w2, b2 = prepared["b1"], prepared["w2"], prepared["b2"]
    w3, b3 = prepared["w3"], prepared["b3"]
    Hd_pad = w2.shape[0]
    O = w3.shape[1]
    assert w1fh.shape[0] == F + H, "prepared params do not match feature/hidden sizes"
    assert w1m.shape[0] == (M * E if fold_mailbox else E), \
        "prepared params do not match mailbox shape / fold_mailbox setting"

    # ---- VMEM-aware node-tile sizing (matters most on v7x's 64 MiB VMEM) ----
    in_item = mailbox.dtype.itemsize            # activations streamed un-cast
    out_item = np.dtype(out_dtype).itemsize
    weight_bytes = (1 if single_buffer else 2) * sum(
        int(a.size) * a.dtype.itemsize for a in (w1m, w1fh, b1, w2, b2, w3, b3))
    per_row = 2 * (M * E + F + H) * in_item     # double-buffered activation streams
    per_row += 2 * O * out_item                 # double-buffered output stream
    per_row += 3 * Hd_pad * 4 + 4 * O           # h1/h2/accumulator intermediates
    vmem_budget = int(vmem_cap * 0.75)
    avail = vmem_budget - weight_bytes - (2 << 20)   # headroom for Mosaic scratch
    TN = min(int(block_n), max(16, avail // per_row))
    TN = max(16, (TN // 16) * 16)               # 16-sublane multiple (bf16-safe)
    if N >= 32:
        # Keep >= 2 grid steps so both v7x TensorCores get work (harmless on 1-TC chips).
        TN = min(TN, _round_up(pl.cdiv(N, 2), 16))
    if TN >= N:
        TN = N                                  # single full block (always layout-legal)
    grid_n = pl.cdiv(N, TN)

    # ---- Activation streams: no cast / no pad passes in the wrapper ----
    if fold_mailbox:
        mb = mailbox.reshape(N, M * E)          # free: row-major contiguous
        mb_spec = pl.BlockSpec((TN, M * E), _row_index_map(2))
    else:
        mb = mailbox
        mb_spec = pl.BlockSpec((TN, M, E), _row_index_map(3))
    # (F+H) << M*E, so fusing features+hidden into one stream is a cheap wrapper
    # pass that turns two tiny layer-1 dots into one.
    fh = jnp.concatenate([node_features, node_hidden_rep], axis=1)

    res = functools.partial(_resident_spec, single_buffer=single_buffer)
    kernel = functools.partial(node_network_kernel, fold_mailbox=fold_mailbox)

    out = pl.pallas_call(
        kernel,
        out_shape=jax.ShapeDtypeStruct((N, O), out_dtype),
        grid=(grid_n,),
        in_specs=[
            mb_spec,                                        # mailbox (streamed)
            pl.BlockSpec((TN, F + H), _row_index_map(2)),   # feat ++ hidden (streamed)
            res(w1m.shape),                                 # W1 mailbox slice
            res(w1fh.shape),                                # W1 feat/hidden slice
            res(b1.shape),                                  # b1
            res(w2.shape),                                  # W2
            res(b2.shape),                                  # b2
            res(w3.shape),                                  # W3
            res(b3.shape),                                  # b3
        ],
        out_specs=pl.BlockSpec((TN, O), _row_index_map(2)),
        compiler_params=pltpu.CompilerParams(
            dimension_semantics=("parallel",),
            vmem_limit_bytes=vmem_budget,
        ),
    )(mb, fh, w1m, w1fh, b1, w2, b2, w3, b3)

    return {"node_hidden_rep": out}


def node_network_forward(mailbox, node_features, node_hidden_rep, prepared, *,
                         fold_mailbox, block_n=1024, out_dtype=None):
    """Pallas forward. Returns {'node_hidden_rep': (N, output_size)} like the torch module.

    `prepared` comes from prepare_params(). The output dtype defaults to the
    prepared weights' compute dtype (bf16 fast path) to minimize the HBM
    writeback stream; pass out_dtype=jnp.float32 for an exact-width output.
    """
    if out_dtype is None:
        out_dtype = prepared["w2"].dtype
    return _forward_impl(
        mailbox, node_features, node_hidden_rep, prepared,
        fold_mailbox=bool(fold_mailbox),
        block_n=int(block_n),
        out_dtype=np.dtype(out_dtype),
        single_buffer=_single_buffer_supported(),
        vmem_cap=_vmem_capacity_bytes(),
    )


def init_params(key, inputsize, hidden_layer_size, output_size):
    """Deterministic parameter init (weights stored as (in, out), y = x @ W + b)."""
    ks = jax.random.split(key, 6)
    w1 = jax.random.normal(ks[0], (inputsize, hidden_layer_size), jnp.float32) * 0.05
    b1 = jax.random.normal(ks[1], (hidden_layer_size,), jnp.float32) * 0.05
    w2 = jax.random.normal(ks[2], (hidden_layer_size, hidden_layer_size), jnp.float32) * 0.05
    b2 = jax.random.normal(ks[3], (hidden_layer_size,), jnp.float32) * 0.05
    w3 = jax.random.normal(ks[4], (hidden_layer_size, output_size), jnp.float32) * 0.05
    b3 = jax.random.normal(ks[5], (output_size,), jnp.float32) * 0.05
    return (w1, b1, w2, b2, w3, b3)


def reference_forward(mailbox, node_features, node_hidden_rep, params):
    """Plain-JAX f32 reference mirroring the torch forward."""
    w1, b1, w2, b2, w3, b3 = params
    msg_sum = jnp.sum(mailbox, axis=1)
    x = jnp.concatenate([msg_sum, node_features, node_hidden_rep], axis=1)
    h1 = jnp.maximum(x @ w1 + b1, 0.0)
    h2 = jnp.maximum(h1 @ w2 + b2, 0.0)
    return h2 @ w3 + b3


if __name__ == "__main__":
    # Small synthetic shapes consistent with the module's forward:
    N = 8        # number of nodes
    M = 4        # messages per node (mailbox dim=1)
    E = 32       # edge hidden representation size
    F = 16       # node feature size
    H = 32       # node hidden representation size
    inputsize = E + F + H          # 80
    hidden_layer_size = 64
    output_size = 32

    key = jax.random.PRNGKey(0)
    k_mb, k_f, k_h, k_p = jax.random.split(key, 4)
    mailbox = jax.random.normal(k_mb, (N, M, E), jnp.float32)
    node_features = jax.random.normal(k_f, (N, F), jnp.float32)
    node_hidden_rep = jax.random.normal(k_h, (N, H), jnp.float32)
    params = init_params(k_p, inputsize, hidden_layer_size, output_size)

    ref = reference_forward(mailbox, node_features, node_hidden_rep, params)

    # f32 path: tight check of tiling / fold / padding correctness.
    prep_f32, fold_f32 = prepare_params(
        params, num_messages=M, edge_size=E, feature_size=F, hidden_size=H,
        compute_dtype=jnp.float32)
    out_f32 = node_network_forward(
        mailbox, node_features, node_hidden_rep, prep_f32,
        fold_mailbox=fold_f32, out_dtype=jnp.float32)['node_hidden_rep']
    out_f32 = jax.block_until_ready(out_f32)
    assert out_f32.shape == (N, output_size)
    assert jnp.allclose(out_f32, ref, atol=1e-4, rtol=1e-4), "f32 kernel mismatch vs reference"

    # bf16 fast path (default): bf16 compute + bf16 output, f32 MXU accumulation.
    prep_bf16, fold_bf16 = prepare_params(
        params, num_messages=M, edge_size=E, feature_size=F, hidden_size=H)
    out_bf16 = node_network_forward(
        mailbox, node_features, node_hidden_rep, prep_bf16,
        fold_mailbox=fold_bf16)['node_hidden_rep']
    out_bf16 = jax.block_until_ready(out_bf16)
    assert out_bf16.shape == (N, output_size)
    assert jnp.allclose(out_bf16.astype(jnp.float32), ref, atol=5e-2, rtol=5e-2), \
        "bf16 kernel mismatch vs reference"

    # Large-M style fallback: in-kernel mailbox reduction instead of the tiled-W1 fold.
    prep_red, fold_red = prepare_params(
        params, num_messages=M, edge_size=E, feature_size=F, hidden_size=H,
        fold_mailbox=False)
    out_red = node_network_forward(
        mailbox, node_features, node_hidden_rep, prep_red,
        fold_mailbox=fold_red)['node_hidden_rep']
    out_red = jax.block_until_ready(out_red)
    assert out_red.shape == (N, output_size)
    assert jnp.allclose(out_red.astype(jnp.float32), ref, atol=5e-2, rtol=5e-2), \
        "reduce-path kernel mismatch vs reference"

    print("KERNEL_OK")
</pallas_src>

<mosaic_0001>
module attributes {stable_mosaic.version = 11 : i64} {
  func.func @_probe_kernel(%arg0: i32, %arg1: memref<8x128xf32, #tpu.memory_space<vmem>>, %arg2: memref<8x128xf32, #tpu.memory_space<vmem>>) attributes {dimension_semantics = [#tpu.dimension_semantics<arbitrary>], iteration_bounds = array<i64: 1>, scalar_prefetch = 0 : i64, scratch_operands = 0 : i64, tpu.core_type = #tpu.core_type<tc>, window_params = [{pipeline_mode = #tpu.pipeline_mode<synchronous>, transform_indices = @transform_0, window_bounds = array<i64: 8, 128>}, {transform_indices = @transform_1, window_bounds = array<i64: 8, 128>}]} {
    %c0 = arith.constant 0 : index
    %c0_0 = arith.constant 0 : index
    %0 = vector.load %arg1[%c0, %c0_0] : memref<8x128xf32, #tpu.memory_space<vmem>>, vector<8x128xf32>
    %cst = arith.constant 1.000000e+00 : f32
    %1 = vector.broadcast %cst : f32 to vector<8x128xf32>
    %2 = arith.addf %0, %1 : vector<8x128xf32>
    %c0_1 = arith.constant 0 : index
    %c0_2 = arith.constant 0 : index
    %3 = vector.load %arg2[%c0_1, %c0_2] : memref<8x128xf32, #tpu.memory_space<vmem>>, vector<8x128xf32>
    tpu.vector_store %arg2[%c0_1, %c0_2], %2 {strides = array<i32>} : memref<8x128xf32, #tpu.memory_space<vmem>>, vector<8x128xf32>,
    return
  }
  func.func @transform_0(%arg0: i32) -> (i32, i32) {
    %c0_i32 = arith.constant 0 : i32
    %c0_i32_0 = arith.constant 0 : i32
    %c0_i32_1 = arith.constant 0 : i32
    return %c0_i32, %c0_i32_0 : i32, i32
  }
  func.func @transform_1(%arg0: i32) -> (i32, i32) {
    %c0_i32 = arith.constant 0 : i32
    %c0_i32_0 = arith.constant 0 : i32
    return %arg0, %c0_i32 : i32, i32
  }
}

module attributes {stable_mosaic.version = 11 : i64} {
  func.func @node_network_kernel(%arg0: i32, %arg1: memref<8x128xf32, #tpu.memory_space<vmem>>, %arg2: memref<8x48xf32, #tpu.memory_space<vmem>>, %arg3: memref<128x128xf32, #tpu.memory_space<vmem>>, %arg4: memref<48x128xf32, #tpu.memory_space<vmem>>, %arg5: memref<1x128xf32, #tpu.memory_space<vmem>>, %arg6: memref<128x128xf32, #tpu.memory_space<vmem>>, %arg7: memref<1x128xf32, #tpu.memory_space<vmem>>, %arg8: memref<128x32xf32, #tpu.memory_space<vmem>>, %arg9: memref<1x32xf32, #tpu.memory_space<vmem>>, %arg10: memref<8x32xf32, #tpu.memory_space<vmem>>) attributes {dimension_semantics = [#tpu.dimension_semantics<parallel>], iteration_bounds = array<i64: 1>, scalar_prefetch = 0 : i64, scratch_operands = 0 : i64, tpu.core_type = #tpu.core_type<tc>, window_params = [{transform_indices = @transform_0, window_bounds = array<i64: 8, 128>}, {transform_indices = @transform_1, window_bounds = array<i64: 8, 48>}, {pipeline_mode = #tpu.pipeline_mode<synchronous>, transform_indices = @transform_2, window_bounds = array<i64: 128, 128>}, {pipeline_mode = #tpu.pipeline_mode<synchronous>, transform_indices = @transform_3, window_bounds = array<i64: 48, 128>}, {pipeline_mode = #tpu.pipeline_mode<synchronous>, transform_indices = @transform_4, window_bounds = array<i64: 1, 128>}, {pipeline_mode = #tpu.pipeline_mode<synchronous>, transform_indices = @transform_5, window_bounds = array<i64: 128, 128>}, {pipeline_mode = #tpu.pipeline_mode<synchronous>, transform_indices = @transform_6, window_bounds = array<i64: 1, 128>}, {pipeline_mode = #tpu.pipeline_mode<synchronous>, transform_indices = @transform_7, window_bounds = array<i64: 128, 32>}, {pipeline_mode = #tpu.pipeline_mode<synchronous>, transform_indices = @transform_8, window_bounds = array<i64: 1, 32>}, {transform_indices = @transform_9, window_bounds = array<i64: 8, 32>}]} {
    %c0 = arith.constant 0 : index
    %c0_0 = arith.constant 0 : index
    %0 = vector.load %arg1[%c0, %c0_0] : memref<8x128xf32, #tpu.memory_space<vmem>>, vector<8x128xf32>
    %c0_1 = arith.constant 0 : index
    %c0_2 = arith.constant 0 : index
    %1 = vector.load %arg2[%c0_1, %c0_2] : memref<8x48xf32, #tpu.memory_space<vmem>>, vector<8x48xf32>
    %c0_3 = arith.constant 0 : index
    %c0_4 = arith.constant 0 : index
    %2 = vector.load %arg3[%c0_3, %c0_4] : memref<128x128xf32, #tpu.memory_space<vmem>>, vector<128x128xf32>
    %cst = arith.constant dense<0.000000e+00> : vector<8x128xf32>
    %3 = tpu.matmul %0, %2, %cst {dimension_numbers = #tpu.dot_dimension_numbers<[1], [0], [0], [1], [0, 0, 1, 1], [], []>} : vector<8x128xf32>, vector<128x128xf32>, vector<8x128xf32> -> vector<8x128xf32>
    %c0_5 = arith.constant 0 : index
    %c0_6 = arith.constant 0 : index
    %4 = vector.load %arg4[%c0_5, %c0_6] : memref<48x128xf32, #tpu.memory_space<vmem>>, vector<48x128xf32>
    %cst_7 = arith.constant dense<0.000000e+00> : vector<8x128xf32>
    %5 = tpu.matmul %1, %4, %cst_7 {dimension_numbers = #tpu.dot_dimension_numbers<[1], [0], [0], [1], [0, 0, 1, 1], [], []>} : vector<8x48xf32>, vector<48x128xf32>, vector<8x128xf32> -> vector<8x128xf32>
    %6 = arith.addf %3, %5 : vector<8x128xf32>
    %c0_8 = arith.constant 0 : index
    %c0_9 = arith.constant 0 : index
    %7 = vector.load %arg5[%c0_8, %c0_9] : memref<1x128xf32, #tpu.memory_space<vmem>>, vector<1x128xf32>
    %8 = vector.broadcast %7 : vector<1x128xf32> to vector<8x128xf32>
    %9 = arith.addf %6, %8 : vector<8x128xf32>
    %cst_10 = arith.constant 0.000000e+00 : f32
    %10 = vector.broadcast %cst_10 : f32 to vector<8x128xf32>
    %11 = arith.maximumf %9, %10 : vector<8x128xf32>
    %c0_11 = arith.constant 0 : index
    %c0_12 = arith.constant 0 : index
    %12 = vector.load %arg6[%c0_11, %c0_12] : memref<128x128xf32, #tpu.memory_space<vmem>>, vector<128x128xf32>
    %cst_13 = arith.constant dense<0.000000e+00> : vector<8x128xf32>
    %13 = tpu.matmul %11, %12, %cst_13 {dimension_numbers = #tpu.dot_dimension_numbers<[1], [0], [0], [1], [0, 0, 1, 1], [], []>} : vector<8x128xf32>, vector<128x128xf32>, vector<8x128xf32> -> vector<8x128xf32>
    %c0_14 = arith.constant 0 : index
    %c0_15 = arith.constant 0 : index
    %14 = vector.load %arg7[%c0_14, %c0_15] : memref<1x128xf32, #tpu.memory_space<vmem>>, vector<1x128xf32>
    %15 = vector.broadcast %14 : vector<1x128xf32> to vector<8x128xf32>
    %16 = arith.addf %13, %15 : vector<8x128xf32>
    %cst_16 = arith.constant 0.000000e+00 : f32
    %17 = vector.broadcast %cst_16 : f32 to vector<8x128xf32>
    %18 = arith.maximumf %16, %17 : vector<8x128xf32>
    %c0_17 = arith.constant 0 : index
    %c0_18 = arith.constant 0 : index
    %19 = vector.load %arg8[%c0_17, %c0_18] : memref<128x32xf32, #tpu.memory_space<vmem>>, vector<128x32xf32>
    %cst_19 = arith.constant dense<0.000000e+00> : vector<8x32xf32>
    %20 = tpu.matmul %18, %19, %cst_19 {dimension_numbers = #tpu.dot_dimension_numbers<[1], [0], [0], [1], [0, 0, 1, 1], [], []>} : vector<8x128xf32>, vector<128x32xf32>, vector<8x32xf32> -> vector<8x32xf32>
    %c0_20 = arith.constant 0 : index
    %c0_21 = arith.constant 0 : index
    %21 = vector.load %arg9[%c0_20, %c0_21] : memref<1x32xf32, #tpu.memory_space<vmem>>, vector<1x32xf32>
    %22 = vector.broadcast %21 : vector<1x32xf32> to vector<8x32xf32>
    %23 = arith.addf %20, %22 : vector<8x32xf32>
    %c0_22 = arith.constant 0 : index
    %c0_23 = arith.constant 0 : index
    %24 = vector.load %arg10[%c0_22, %c0_23] : memref<8x32xf32, #tpu.memory_space<vmem>>, vector<8x32xf32>
    tpu.vector_store %arg10[%c0_22, %c0_23], %23 {strides = array<i32>} : memref<8x32xf32, #tpu.memory_space<vmem>>, vector<8x32xf32>,
    return
  }
  func.func @transform_0(%arg0: i32) -> (i32, i32) {
    %c0_i32 = arith.constant 0 : i32
    %c0_i32_0 = arith.constant 0 : i32
    return %arg0, %c0_i32 : i32, i32
  }
  func.func @transform_1(%arg0: i32) -> (i32, i32) {
    %c0_i32 = arith.constant 0 : i32
    %c0_i32_0 = arith.constant 0 : i32
    return %arg0, %c0_i32 : i32, i32
  }
  func.func @transform_2(%arg0: i32) -> (i32, i32) {
    %c0_i32 = arith.constant 0 : i32
    %c0_i32_0 = arith.constant 0 : i32
    %c0_i32_1 = arith.constant 0 : i32
    return %c0_i32, %c0_i32_0 : i32, i32
  }
  func.func @transform_3(%arg0: i32) -> (i32, i32) {
    %c0_i32 = arith.constant 0 : i32
    %c0_i32_0 = arith.constant 0 : i32
    %c0_i32_1 = arith.constant 0 : i32
    return %c0_i32, %c0_i32_0 : i32, i32
  }
  func.func @transform_4(%arg0: i32) -> (i32, i32) {
    %c0_i32 = arith.constant 0 : i32
    %c0_i32_0 = arith.constant 0 : i32
    %c0_i32_1 = arith.constant 0 : i32
    return %c0_i32, %c0_i32_0 : i32, i32
  }
  func.func @transform_5(%arg0: i32) -> (i32, i32) {
    %c0_i32 = arith.constant 0 : i32
    %c0_i32_0 = arith.constant 0 : i32
    %c0_i32_1 = arith.constant 0 : i32
    return %c0_i32, %c0_i32_0 : i32, i32
  }
  func.func @transform_6(%arg0: i32) -> (i32, i32) {
    %c0_i32 = arith.constant 0 : i32
    %c0_i32_0 = arith.constant 0 : i32
    %c0_i32_1 = arith.constant 0 : i32
    return %c0_i32, %c0_i32_0 : i32, i32
  }
  func.func @transform_7(%arg0: i32) -> (i32, i32) {
    %c0_i32 = arith.constant 0 : i32
    %c0_i32_0 = arith.constant 0 : i32
    %c0_i32_1 = arith.constant 0 : i32
    return %c0_i32, %c0_i32_0 : i32, i32
  }
  func.func @transform_8(%arg0: i32) -> (i32, i32) {
    %c0_i32 = arith.constant 0 : i32
    %c0_i32_0 = arith.constant 0 : i32
    %c0_i32_1 = arith.constant 0 : i32
    return %c0_i32, %c0_i32_0 : i32, i32
  }
  func.func @transform_9(%arg0: i32) -> (i32, i32) {
    %c0_i32 = arith.constant 0 : i32
    %c0_i32_0 = arith.constant 0 : i32
    return %arg0, %c0_i32 : i32, i32
  }
}

</mosaic_0001>

<llo_original>
// kernel: tpu_custom_call.1
$region0: #{tpu_custom_call.1}
  #allocation0 [shape = 'u32[]', space=smem, size = 0x4, offset = 0x4, fixed_abs, tag = 'smem constant byte address 0x4 - core index']
  #allocation1 [shape = 'u32[144,128]{1,0:T(1,128)}', space=vmem, size = 0x12000, scoped, tag = 'internal scratch']
  %s0 = inlined_call_operand.hbm [shape: f32[8,128], index: 0, kind: input, shape index: {}]
  %s1 = inlined_call_operand.hbm [shape: f32[8,128], index: 1, kind: output, shape index: {}]
  %s2 = sld [smem:[#allocation0]]
  $region18: #{tpu_custom_call.1} parent=0
    _
  %s4 = ssub.s32 1, %s2
  %s5 = scalar_select 0, %s4, %s2
  $region1: #{tpu_custom_call.1} parent=0
    #allocation2 [shape = 'u8[4096]{0}', space=vmem, size = 0x1000, scoped, tag = 'input window, operand 0, single buffered']
    #allocation3 [shape = 's32[1]{0}', space=sflag, size = 0x4, scoped, tag = 'scoped memory for tpu_custom_call.1']
    #allocation4 [shape = 's32[1]{0}', space=sflag, size = 0x4, scoped, tag = 'scoped memory for tpu_custom_call.1']
    #allocation5 [shape = 'u8[4096]{0}', space=vmem, size = 0x1000, scoped, tag = 'output window, operand 0, single buffered']
    %6 = vsyncpa [#allocation3], 0
    %7 = vsyncpa [#allocation4], 0
    // Predicated region
    $region2: #{tpu_custom_call.1} parent=1 // pred_check
      _
    $region3: #{tpu_custom_call.1} parent=1 // pred_check_branch
      %9 = sbr.rel (0) target = $region5
    $region4: #{tpu_custom_call.1} parent=1 // pred_region
      %s11 = ssub.s32 128, 128
      %12 = vsyncadd [#allocation3], %s11
      %s14 = sshll.u32 [#allocation2], 4
      %s15 = int_to_ptr.vmem [resolvable:$true] %s14
      %17 = dma.hbm_to_vmem [thread:$0]  %s0, 128, %s15, [#allocation3]
    $region5: #{tpu_custom_call.1} parent=1 // pred_fallthru
      _
    // Predicated region
    $region6: #{tpu_custom_call.1} parent=1 // pred_check
      _
    $region7: #{tpu_custom_call.1} parent=1 // pred_check_branch
      %19 = sbr.rel (0) target = $region9
    $region8: #{tpu_custom_call.1} parent=1 // pred_region
      %20 = dma.done [#allocation3], 128
    $region9: #{tpu_custom_call.1} parent=1 // pred_fallthru
      _
    %v21 = vld [vmem:[#allocation2] sm:$0xff]
    %v22 = vadd.f32 %v21, 1.0
    %23 = vst [vmem:[#allocation5] sm:$0xff] %v22
    // Predicated region
    $region10: #{tpu_custom_call.1} parent=1 // pred_check
      _
    $region11: #{tpu_custom_call.1} parent=1 // pred_check_branch
      %25 = sbr.rel (0) target = $region13
    $region12: #{tpu_custom_call.1} parent=1 // pred_region
      %s27 = ssub.s32 128, 128
      %28 = vsyncadd [#allocation4], %s27
      %s30 = sshll.u32 [#allocation5], 4
      %s31 = int_to_ptr.vmem [resolvable:$true] %s30
      %33 = dma.vmem_to_hbm [thread:$0]  %s31, 128, %s1, [#allocation4]
    $region13: #{tpu_custom_call.1} parent=1 // pred_fallthru
      _
    // Predicated region
    $region14: #{tpu_custom_call.1} parent=1 // pred_check
      _
    $region15: #{tpu_custom_call.1} parent=1 // pred_check_branch
      %35 = sbr.rel (0) target = $region17
    $region16: #{tpu_custom_call.1} parent=1 // pred_region
      %36 = dma.done [#allocation4], 128
    $region17: #{tpu_custom_call.1} parent=1 // pred_fallthru
      _
    %37 = vsyncpa [#allocation3], 1
    %38 = vsyncpa [#allocation4], 1

// kernel: _forward_impl.1
$region0: #{_forward_impl.1}
  #allocation0 [shape = 'u32[]', space=smem, size = 0x4, offset = 0x4, fixed_abs, tag = 'smem constant byte address 0x4 - core index']
  #allocation1 [shape = 'u32[144,128]{1,0:T(1,128)}', space=vmem, size = 0x12000, scoped, tag = 'internal scratch']
  %s0 = inlined_call_operand.vmem [shape: f32[8,128], index: 0, kind: input, shape index: {}]
  %s1 = inlined_call_operand.vmem [shape: f32[8,48], index: 1, kind: input, shape index: {}]
  %s2 = inlined_call_operand.vmem [shape: f32[128,128], index: 2, kind: input, shape index: {}]
  %s3 = inlined_call_operand.vmem [shape: f32[48,128], index: 3, kind: input, shape index: {}]
  %s4 = inlined_call_operand.vmem [shape: f32[1,128], index: 4, kind: input, shape index: {}]
  %s5 = inlined_call_operand.hbm [shape: f32[128,128], index: 5, kind: input, shape index: {}]
  %s6 = inlined_call_operand.vmem [shape: f32[1,128], index: 6, kind: input, shape index: {}]
  %s7 = inlined_call_operand.vmem [shape: f32[128,32], index: 7, kind: input, shape index: {}]
  %s8 = inlined_call_operand.vmem [shape: f32[1,32], index: 8, kind: input, shape index: {}]
  %s9 = inlined_call_operand.hbm [shape: f32[8,32], index: 9, kind: output, shape index: {}]
  %s10 = sld [smem:[#allocation0]]
  $region50: #{_forward_impl.1} parent=0
    _
  %s12 = ssub.s32 1, %s10
  %s13 = scalar_select 0, %s12, %s10
  $region1: #{_forward_impl.1} parent=0
    #allocation2 [shape = 'u8[65536]{0}', space=vmem, size = 0x10000, scoped, tag = 'input window, operand 5, single buffered']
    #allocation3 [shape = 's32[1]{0}', space=sflag, size = 0x4, scoped, tag = 'scoped memory for _forward_impl.1']
    #allocation4 [shape = 's32[1]{0}', space=sflag, size = 0x4, scoped, tag = 'scoped memory for _forward_impl.1']
    #allocation5 [shape = 'u8[4096]{0}', space=vmem, size = 0x1000, scoped, tag = 'output window, operand 0, single buffered']
    %14 = vsyncpa [#allocation3], 0
    %15 = vsyncpa [#allocation4], 0
    // Predicated region
    $region2: #{_forward_impl.1} parent=1 // pred_check
      _
    $region3: #{_forward_impl.1} parent=1 // pred_check_branch
      %17 = sbr.rel (0) target = $region5
    $region4: #{_forward_impl.1} parent=1 // pred_region
      _
    $region5: #{_forward_impl.1} parent=1 // pred_fallthru
      _
    // Predicated region
    $region6: #{_forward_impl.1} parent=1 // pred_check
      _
    $region7: #{_forward_impl.1} parent=1 // pred_check_branch
      %19 = sbr.rel (0) target = $region9
    $region8: #{_forward_impl.1} parent=1 // pred_region
      _
    $region9: #{_forward_impl.1} parent=1 // pred_fallthru
      _
    // Predicated region
    $region10: #{_forward_impl.1} parent=1 // pred_check
      _
    $region11: #{_forward_impl.1} parent=1 // pred_check_branch
      %21 = sbr.rel (0) target = $region13
    $region12: #{_forward_impl.1} parent=1 // pred_region
      _
    $region13: #{_forward_impl.1} parent=1 // pred_fallthru
      _
    // Predicated region
    $region14: #{_forward_impl.1} parent=1 // pred_check
      _
    $region15: #{_forward_impl.1} parent=1 // pred_check_branch
      %23 = sbr.rel (0) target = $region17
    $region16: #{_forward_impl.1} parent=1 // pred_region
      _
    $region17: #{_forward_impl.1} parent=1 // pred_fallthru
      _
    // Predicated region
    $region18: #{_forward_impl.1} parent=1 // pred_check
      _
    $region19: #{_forward_impl.1} parent=1 // pred_check_branch
      %25 = sbr.rel (0) target = $region21
    $region20: #{_forward_impl.1} parent=1 // pred_region
      _
    $region21: #{_forward_impl.1} parent=1 // pred_fallthru
      _
    // Predicated region
    $region22: #{_forward_impl.1} parent=1 // pred_check
      _
    $region23: #{_forward_impl.1} parent=1 // pred_check_branch
      %27 = sbr.rel (0) target = $region25
    $region24: #{_forward_impl.1} parent=1 // pred_region
      %s29 = ssub.s32 2048, 2048
      %30 = vsyncadd [#allocation3], %s29
      %s31 = sshll.u32 [#allocation2], 4
      %s32 = int_to_ptr.vmem [resolvable:$true] %s31
      %37 = dma.hbm_to_vmem [thread:$0]  %s5, 2048, %s32, [#allocation3], 128, 128, 8
    $region25: #{_forward_impl.1} parent=1 // pred_fallthru
      _
    // Predicated region
    $region26: #{_forward_impl.1} parent=1 // pred_check
      _
    $region27: #{_forward_impl.1} parent=1 // pred_check_branch
      %39 = sbr.rel (0) target = $region29
    $region28: #{_forward_impl.1} parent=1 // pred_region
      _
    $region29: #{_forward_impl.1} parent=1 // pred_fallthru
      _
    // Predicated region
    $region30: #{_forward_impl.1} parent=1 // pred_check
      _
    $region31: #{_forward_impl.1} parent=1 // pred_check_branch
      %41 = sbr.rel (0) target = $region33
    $region32: #{_forward_impl.1} parent=1 // pred_region
      _
    $region33: #{_forward_impl.1} parent=1 // pred_fallthru
      _
    // Predicated region
    $region34: #{_forward_impl.1} parent=1 // pred_check
      _
    $region35: #{_forward_impl.1} parent=1 // pred_check_branch
      %43 = sbr.rel (0) target = $region37
    $region36: #{_forward_impl.1} parent=1 // pred_region
      _
    $region37: #{_forward_impl.1} parent=1 // pred_fallthru
      _
    // Predicated region
    $region38: #{_forward_impl.1} parent=1 // pred_check
      _
    $region39: #{_forward_impl.1} parent=1 // pred_check_branch
      %45 = sbr.rel (0) target = $region41
    $region40: #{_forward_impl.1} parent=1 // pred_region
      %46 = dma.done [#allocation3], 2048
    $region41: #{_forward_impl.1} parent=1 // pred_fallthru
      _
    %v47 = vld [vmem:[%s0] sm:$0xff]
    %v48 = vld [vmem:[%s1] sm:$0xff]
    %v49 = vld [vmem:[%s2] sm:$0xff]
    %v50 = vld [vmem:[%s2 + $0x8] sm:$0xff]
    %v51 = vld [vmem:[%s2 + $0x10] sm:$0xff]
    %v52 = vld [vmem:[%s2 + $0x18] sm:$0xff]
    %v53 = vld [vmem:[%s2 + $0x20] sm:$0xff]
    %v54 = vld [vmem:[%s2 + $0x28] sm:$0xff]
    %v55 = vld [vmem:[%s2 + $0x30] sm:$0xff]
    %v56 = vld [vmem:[%s2 + $0x38] sm:$0xff]
    %v57 = vld [vmem:[%s2 + $0x40] sm:$0xff]
    %v58 = vld [vmem:[%s2 + $0x48] sm:$0xff]
    %v59 = vld [vmem:[%s2 + $0x50] sm:$0xff]
    %v60 = vld [vmem:[%s2 + $0x58] sm:$0xff]
    %v61 = vld [vmem:[%s2 + $0x60] sm:$0xff]
    %v62 = vld [vmem:[%s2 + $0x68] sm:$0xff]
    %v63 = vld [vmem:[%s2 + $0x70] sm:$0xff]
    %v64 = vld [vmem:[%s2 + $0x78] sm:$0xff]
    %v65 = vld [vmem:[%s3] sm:$0xff]
    %v66 = vld [vmem:[%s3 + $0x8] sm:$0xff]
    %v67 = vld [vmem:[%s3 + $0x10] sm:$0xff]
    %v68 = vld [vmem:[%s3 + $0x18] sm:$0xff]
    %v69 = vld [vmem:[%s3 + $0x20] sm:$0xff]
    %v70 = vld [vmem:[%s3 + $0x28] sm:$0xff]
    %vm71 = vcmask 392192
    %v73 = vsel %vm71, %v48, 0
    %75 = vmatprep.subr.mxu0 0.0
    %76 = vmatpush1.msra.mxu0 0.0
    %77 = vmatprep.subr.mxu0 0.0
    %78 = vmatpush1.msra.mxu0 0.0
    %79 = vmatprep.subr.mxu0 0.0
    %80 = vmatpush1.msra.mxu0 0.0
    %81 = vmatprep.subr.mxu0 0.0
    %82 = vmatpush1.msra.mxu0 0.0
    %83 = vmatprep.subr.mxu0 0.0
    %84 = vmatpush1.msra.mxu0 0.0
    %85 = vmatprep.subr.mxu0 0.0
    %86 = vmatpush1.msra.mxu0 0.0
    %87 = vmatprep.subr.mxu0 0.0
    %88 = vmatpush1.msra.mxu0 0.0
    %89 = vmatprep.subr.mxu0 0.0
    %90 = vmatpush1.msra.mxu0 0.0
    %91 = vmatprep.subr.mxu0 0.0
    %92 = vmatpush1.msra.mxu0 0.0
    %93 = vmatprep.subr.mxu0 0.0
    %94 = vmatpush1.msra.mxu0 0.0
    %95 = vmatprep.subr.mxu0 0.0
    %96 = vmatpush1.msra.mxu0 %v70
    %97 = vmatprep.subr.mxu0 0.0
    %98 = vmatpush1.msra.mxu0 %v69
    %99 = vmatprep.subr.mxu0 0.0
    %100 = vmatpush1.msra.mxu0 %v68
    %101 = vmatprep.subr.mxu0 0.0
    %102 = vmatpush1.msra.mxu0 %v67
    %103 = vmatprep.subr.mxu0 0.0
    %104 = vmatpush1.msra.mxu0 %v66
    %105 = vmatprep.subr.mxu0 0.0
    %106 = vmatpush1.msra.mxu0 %v65
    %107 = vmatprep.subr.mxu0 0.0
    %108 = vmatpush2.msra.mxu0 0.0
    %109 = vmatprep.subr.mxu0 0.0
    %110 = vmatpush2.msra.mxu0 0.0
    %111 = vmatprep.subr.mxu0 0.0
    %112 = vmatpush2.msra.mxu0 0.0
    %113 = vmatprep.subr.mxu0 0.0
    %114 = vmatpush2.msra.mxu0 0.0
    %115 = vmatprep.subr.mxu0 0.0
    %116 = vmatpush2.msra.mxu0 0.0
    %117 = vmatprep.subr.mxu0 0.0
    %118 = vmatpush2.msra.mxu0 0.0
    %119 = vmatprep.subr.mxu0 0.0
    %120 = vmatpush2.msra.mxu0 0.0
    %121 = vmatprep.subr.mxu0 0.0
    %122 = vmatpush2.msra.mxu0 0.0
    %123 = vmatprep.subr.mxu0 0.0
    %124 = vmatpush2.msra.mxu0 0.0
    %125 = vmatprep.subr.mxu0 0.0
    %126 = vmatpush2.msra.mxu0 0.0
    %127 = vmatprep.subr.mxu0 0.0
    %128 = vmatpush2.msra.mxu0 0.0
    %129 = vmatprep.subr.mxu0 0.0
    %130 = vmatpush2.msra.mxu0 0.0
    %131 = vmatprep.subr.mxu0 0.0
    %132 = vmatpush2.msra.mxu0 0.0
    %133 = vmatprep.subr.mxu0 0.0
    %134 = vmatpush2.msra.mxu0 0.0
    %135 = vmatprep.subr.mxu0 0.0
    %136 = vmatpush2.msra.mxu0 0.0
    %137 = vmatprep.subr.mxu0 0.0
    %138 = vmatpush2.msra.mxu0 0.0
    %139 = vmatprep.mubr.f32.mxu0 0.0
    %140 = vmatmul.mubr.f32.gmra.mxu0 %v73
    %v141 = vpop.f32.mrf.mxu0
    %v142 = vadd.f32 0.0, %v141
    %v143 = vpop.f32.mrf.mxu0
    %144 = vdwg.mxu0
    %145 = vmatprep.subr.mxu0 0.0
    %146 = vmatpush1.msra.mxu0 %v64
    %147 = vmatprep.subr.mxu0 0.0
    %148 = vmatpush1.msra.mxu0 %v63
    %149 = vmatprep.subr.mxu0 0.0
    %150 = vmatpush1.msra.mxu0 %v62
    %151 = vmatprep.subr.mxu0 0.0
    %152 = vmatpush1.msra.mxu0 %v61
    %153 = vmatprep.subr.mxu0 0.0
    %154 = vmatpush1.msra.mxu0 %v60
    %155 = vmatprep.subr.mxu0 0.0
    %156 = vmatpush1.msra.mxu0 %v59
    %157 = vmatprep.subr.mxu0 0.0
    %158 = vmatpush1.msra.mxu0 %v58
    %159 = vmatprep.subr.mxu0 0.0
    %160 = vmatpush1.msra.mxu0 %v57
    %161 = vmatprep.subr.mxu0 0.0
    %162 = vmatpush1.msra.mxu0 %v56
    %163 = vmatprep.subr.mxu0 0.0
    %164 = vmatpush1.msra.mxu0 %v55
    %165 = vmatprep.subr.mxu0 0.0
    %166 = vmatpush1.msra.mxu0 %v54
    %167 = vmatprep.subr.mxu0 0.0
    %168 = vmatpush1.msra.mxu0 %v53
    %169 = vmatprep.subr.mxu0 0.0
    %170 = vmatpush1.msra.mxu0 %v52
    %171 = vmatprep.subr.mxu0 0.0
    %172 = vmatpush1.msra.mxu0 %v51
    %173 = vmatprep.subr.mxu0 0.0
    %174 = vmatpush1.msra.mxu0 %v50
    %175 = vmatprep.subr.mxu0 0.0
    %176 = vmatpush1.msra.mxu0 %v49
    %177 = vmatprep.subr.mxu0 0.0
    %178 = vmatpush2.msra.mxu0 0.0
    %179 = vmatprep.subr.mxu0 0.0
    %180 = vmatpush2.msra.mxu0 0.0
    %181 = vmatprep.subr.mxu0 0.0
    %182 = vmatpush2.msra.mxu0 0.0
    %183 = vmatprep.subr.mxu0 0.0
    %184 = vmatpush2.msra.mxu0 0.0
    %185 = vmatprep.subr.mxu0 0.0
    %186 = vmatpush2.msra.mxu0 0.0
    %187 = vmatprep.subr.mxu0 0.0
    %188 = vmatpush2.msra.mxu0 0.0
    %189 = vmatprep.subr.mxu0 0.0
    %190 = vmatpush2.msra.mxu0 0.0
    %191 = vmatprep.subr.mxu0 0.0
    %192 = vmatpush2.msra.mxu0 0.0
    %193 = vmatprep.subr.mxu0 0.0
    %194 = vmatpush2.msra.mxu0 0.0
    %195 = vmatprep.subr.mxu0 0.0
    %196 = vmatpush2.msra.mxu0 0.0
    %197 = vmatprep.subr.mxu0 0.0
    %198 = vmatpush2.msra.mxu0 0.0
    %199 = vmatprep.subr.mxu0 0.0
    %200 = vmatpush2.msra.mxu0 0.0
    %201 = vmatprep.subr.mxu0 0.0
    %202 = vmatpush2.msra.mxu0 0.0
    %203 = vmatprep.subr.mxu0 0.0
    %204 = vmatpush2.msra.mxu0 0.0
    %205 = vmatprep.subr.mxu0 0.0
    %206 = vmatpush2.msra.mxu0 0.0
    %207 = vmatprep.subr.mxu0 0.0
    %208 = vmatpush2.msra.mxu0 0.0
    %209 = vmatprep.mubr.f32.mxu0 0.0
    %210 = vmatmul.mubr.f32.gmra.mxu0 %v47
    %v211 = vpop.f32.mrf.mxu0
    %v212 = vadd.f32 %v142, %v211
    %v213 = vpop.f32.mrf.mxu0
    %214 = vdwg.mxu0
    %v215 = vld [vmem:[%s4] sm:$0x1]
    %v217 = vlaneseq
    %v218 = vshrl.u32 %v217, 7
    %v219 = vsub.s32 0, %v218
    %v220 = vrot.slane %v215, %v219
    %v222 = vadd.f32 %v212, %v220
    %v223 = vmax.f32 %v222, 0.0
    %v224 = vld [vmem:[#allocation2] sm:$0xff]
    %v225 = vld [vmem:[#allocation2 + $0x8] sm:$0xff]
    %v226 = vld [vmem:[#allocation2 + $0x10] sm:$0xff]
    %v227 = vld [vmem:[#allocation2 + $0x18] sm:$0xff]
    %v228 = vld [vmem:[#allocation2 + $0x20] sm:$0xff]
    %v229 = vld [vmem:[#allocation2 + $0x28] sm:$0xff]
    %v230 = vld [vmem:[#allocation2 + $0x30] sm:$0xff]
    %v231 = vld [vmem:[#allocation2 + $0x38] sm:$0xff]
    %v232 = vld [vmem:[#allocation2 + $0x40] sm:$0xff]
    %v233 = vld [vmem:[#allocation2 + $0x48] sm:$0xff]
    %v234 = vld [vmem:[#allocation2 + $0x50] sm:$0xff]
    %v235 = vld [vmem:[#allocation2 + $0x58] sm:$0xff]
    %v236 = vld [vmem:[#allocation2 + $0x60] sm:$0xff]
    %v237 = vld [vmem:[#allocation2 + $0x68] sm:$0xff]
    %v238 = vld [vmem:[#allocation2 + $0x70] sm:$0xff]
    %v239 = vld [vmem:[#allocation2 + $0x78] sm:$0xff]
    %v240 = vld [vmem:[%s6] sm:$0x1]
    %v242 = vlaneseq
    %v243 = vshrl.u32 %v242, 7
    %v244 = vsub.s32 0, %v243
    %v245 = vrot.slane %v240, %v244
    %247 = vmatprep.subr.mxu0 0.0
    %248 = vmatpush1.msra.mxu0 %v239
    %249 = vmatprep.subr.mxu0 0.0
    %250 = vmatpush1.msra.mxu0 %v238
    %251 = vmatprep.subr.mxu0 0.0
    %252 = vmatpush1.msra.mxu0 %v237
    %253 = vmatprep.subr.mxu0 0.0
    %254 = vmatpush1.msra.mxu0 %v236
    %255 = vmatprep.subr.mxu0 0.0
    %256 = vmatpush1.msra.mxu0 %v235
    %257 = vmatprep.subr.mxu0 0.0
    %258 = vmatpush1.msra.mxu0 %v234
    %259 = vmatprep.subr.mxu0 0.0
    %260 = vmatpush1.msra.mxu0 %v233
    %261 = vmatprep.subr.mxu0 0.0
    %262 = vmatpush1.msra.mxu0 %v232
    %263 = vmatprep.subr.mxu0 0.0
    %264 = vmatpush1.msra.mxu0 %v231
    %265 = vmatprep.subr.mxu0 0.0
    %266 = vmatpush1.msra.mxu0 %v230
    %267 = vmatprep.subr.mxu0 0.0
    %268 = vmatpush1.msra.mxu0 %v229
    %269 = vmatprep.subr.mxu0 0.0
    %270 = vmatpush1.msra.mxu0 %v228
    %271 = vmatprep.subr.mxu0 0.0
    %272 = vmatpush1.msra.mxu0 %v227
    %273 = vmatprep.subr.mxu0 0.0
    %274 = vmatpush1.msra.mxu0 %v226
    %275 = vmatprep.subr.mxu0 0.0
    %276 = vmatpush1.msra.mxu0 %v225
    %277 = vmatprep.subr.mxu0 0.0
    %278 = vmatpush1.msra.mxu0 %v224
    %279 = vmatprep.subr.mxu0 0.0
    %280 = vmatpush2.msra.mxu0 0.0
    %281 = vmatprep.subr.mxu0 0.0
    %282 = vmatpush2.msra.mxu0 0.0
    %283 = vmatprep.subr.mxu0 0.0
    %284 = vmatpush2.msra.mxu0 0.0
    %285 = vmatprep.subr.mxu0 0.0
    %286 = vmatpush2.msra.mxu0 0.0
    %287 = vmatprep.subr.mxu0 0.0
    %288 = vmatpush2.msra.mxu0 0.0
    %289 = vmatprep.subr.mxu0 0.0
    %290 = vmatpush2.msra.mxu0 0.0
    %291 = vmatprep.subr.mxu0 0.0
    %292 = vmatpush2.msra.mxu0 0.0
    %293 = vmatprep.subr.mxu0 0.0
    %294 = vmatpush2.msra.mxu0 0.0
    %295 = vmatprep.subr.mxu0 0.0
    %296 = vmatpush2.msra.mxu0 0.0
    %297 = vmatprep.subr.mxu0 0.0
    %298 = vmatpush2.msra.mxu0 0.0
    %299 = vmatprep.subr.mxu0 0.0
    %300 = vmatpush2.msra.mxu0 0.0
    %301 = vmatprep.subr.mxu0 0.0
    %302 = vmatpush2.msra.mxu0 0.0
    %303 = vmatprep.subr.mxu0 0.0
    %304 = vmatpush2.msra.mxu0 0.0
    %305 = vmatprep.subr.mxu0 0.0
    %306 = vmatpush2.msra.mxu0 0.0
    %307 = vmatprep.subr.mxu0 0.0
    %308 = vmatpush2.msra.mxu0 0.0
    %309 = vmatprep.subr.mxu0 0.0
    %310 = vmatpush2.msra.mxu0 0.0
    %311 = vmatprep.mubr.f32.mxu0 0.0
    %312 = vmatmul.mubr.f32.gmra.mxu0 %v223
    %v313 = vpop.f32.mrf.mxu0
    %v314 = vadd.f32 %v245, %v313
    %v315 = vpop.f32.mrf.mxu0
    %316 = vdwg.mxu0
    %v317 = vmax.f32 %v314, 0.0
    %v318 = vld [vmem:[%s7] sm:$0xff]
    %v319 = vld [vmem:[%s7 + $0x8] sm:$0xff]
    %v320 = vld [vmem:[%s7 + $0x10] sm:$0xff]
    %v321 = vld [vmem:[%s7 + $0x18] sm:$0xff]
    %v322 = vld [vmem:[%s7 + $0x20] sm:$0xff]
    %v323 = vld [vmem:[%s7 + $0x28] sm:$0xff]
    %v324 = vld [vmem:[%s7 + $0x30] sm:$0xff]
    %v325 = vld [vmem:[%s7 + $0x38] sm:$0xff]
    %v326 = vld [vmem:[%s7 + $0x40] sm:$0xff]
    %v327 = vld [vmem:[%s7 + $0x48] sm:$0xff]
    %v328 = vld [vmem:[%s7 + $0x50] sm:$0xff]
    %v329 = vld [vmem:[%s7 + $0x58] sm:$0xff]
    %v330 = vld [vmem:[%s7 + $0x60] sm:$0xff]
    %v331 = vld [vmem:[%s7 + $0x68] sm:$0xff]
    %v332 = vld [vmem:[%s7 + $0x70] sm:$0xff]
    %v333 = vld [vmem:[%s7 + $0x78] sm:$0xff]
    %v334 = vld [vmem:[%s8] sm:$0x1]
    %v336 = vlaneseq
    %v337 = vshrl.u32 %v336, 7
    %v338 = vsub.s32 0, %v337
    %v339 = vrot.slane %v334, %v338
    %341 = vmatprep.subr.mxu0 0.0
    %342 = vmatpush1.msra.mxu0 %v333
    %343 = vmatprep.subr.mxu0 0.0
    %344 = vmatpush1.msra.mxu0 %v332
    %345 = vmatprep.subr.mxu0 0.0
    %346 = vmatpush1.msra.mxu0 %v331
    %347 = vmatprep.subr.mxu0 0.0
    %348 = vmatpush1.msra.mxu0 %v330
    %349 = vmatprep.subr.mxu0 0.0
    %350 = vmatpush1.msra.mxu0 %v329
    %351 = vmatprep.subr.mxu0 0.0
    %352 = vmatpush1.msra.mxu0 %v328
    %353 = vmatprep.subr.mxu0 0.0
    %354 = vmatpush1.msra.mxu0 %v327
    %355 = vmatprep.subr.mxu0 0.0
    %356 = vmatpush1.msra.mxu0 %v326
    %357 = vmatprep.subr.mxu0 0.0
    %358 = vmatpush1.msra.mxu0 %v325
    %359 = vmatprep.subr.mxu0 0.0
    %360 = vmatpush1.msra.mxu0 %v324
    %361 = vmatprep.subr.mxu0 0.0
    %362 = vmatpush1.msra.mxu0 %v323
    %363 = vmatprep.subr.mxu0 0.0
    %364 = vmatpush1.msra.mxu0 %v322
    %365 = vmatprep.subr.mxu0 0.0
    %366 = vmatpush1.msra.mxu0 %v321
    %367 = vmatprep.subr.mxu0 0.0
    %368 = vmatpush1.msra.mxu0 %v320
    %369 = vmatprep.subr.mxu0 0.0
    %370 = vmatpush1.msra.mxu0 %v319
    %371 = vmatprep.subr.mxu0 0.0
    %372 = vmatpush1.msra.mxu0 %v318
    %373 = vmatprep.subr.mxu0 0.0
    %374 = vmatpush2.msra.mxu0 0.0
    %375 = vmatprep.subr.mxu0 0.0
    %376 = vmatpush2.msra.mxu0 0.0
    %377 = vmatprep.subr.mxu0 0.0
    %378 = vmatpush2.msra.mxu0 0.0
    %379 = vmatprep.subr.mxu0 0.0
    %380 = vmatpush2.msra.mxu0 0.0
    %381 = vmatprep.subr.mxu0 0.0
    %382 = vmatpush2.msra.mxu0 0.0
    %383 = vmatprep.subr.mxu0 0.0
    %384 = vmatpush2.msra.mxu0 0.0
    %385 = vmatprep.subr.mxu0 0.0
    %386 = vmatpush2.msra.mxu0 0.0
    %387 = vmatprep.subr.mxu0 0.0
    %388 = vmatpush2.msra.mxu0 0.0
    %389 = vmatprep.subr.mxu0 0.0
    %390 = vmatpush2.msra.mxu0 0.0
    %391 = vmatprep.subr.mxu0 0.0
    %392 = vmatpush2.msra.mxu0 0.0
    %393 = vmatprep.subr.mxu0 0.0
    %394 = vmatpush2.msra.mxu0 0.0
    %395 = vmatprep.subr.mxu0 0.0
    %396 = vmatpush2.msra.mxu0 0.0
    %397 = vmatprep.subr.mxu0 0.0
    %398 = vmatpush2.msra.mxu0 0.0
    %399 = vmatprep.subr.mxu0 0.0
    %400 = vmatpush2.msra.mxu0 0.0
    %401 = vmatprep.subr.mxu0 0.0
    %402 = vmatpush2.msra.mxu0 0.0
    %403 = vmatprep.subr.mxu0 0.0
    %404 = vmatpush2.msra.mxu0 0.0
    %405 = vmatprep.mubr.f32.mxu0 0.0
    %406 = vmatmul.mubr.f32.gmra.mxu0 %v317
    %v407 = vpop.f32.mrf.mxu0
    %v408 = vadd.f32 %v339, %v407
    %v409 = vpop.f32.mrf.mxu0
    %410 = vdwg.mxu0
    %vm411 = vcmask 261120
    %412 = vst.msk [vmem:[#allocation5] sm:$0xff] %vm411, %v408
    // Predicated region
    $region42: #{_forward_impl.1} parent=1 // pred_check
      _
    $region43: #{_forward_impl.1} parent=1 // pred_check_branch
      %414 = sbr.rel (0) target = $region45
    $region44: #{_forward_impl.1} parent=1 // pred_region
      %s416 = ssub.s32 128, 128
      %417 = vsyncadd [#allocation4], %s416
      %s419 = sshll.u32 [#allocation5], 4
      %s420 = int_to_ptr.vmem [resolvable:$true] %s419
      %422 = dma.vmem_to_hbm [thread:$0]  %s420, 128, %s9, [#allocation4]
    $region45: #{_forward_impl.1} parent=1 // pred_fallthru
      _
    // Predicated region
    $region46: #{_forward_impl.1} parent=1 // pred_check
      _
    $region47: #{_forward_impl.1} parent=1 // pred_check_branch
      %424 = sbr.rel (0) target = $region49
    $region48: #{_forward_impl.1} parent=1 // pred_region
      %425 = dma.done [#allocation4], 128
    $region49: #{_forward_impl.1} parent=1 // pred_fallthru
      _
    %426 = vsyncpa [#allocation3], 1
    %427 = vsyncpa [#allocation4], 1

</llo_original>
